<compile_context>
chip_gen: v7x
topology: tpu7x:2x2x1
jax: 0.10.0
libtpu: 0.0.40
codegen_flags: <defaults>
</compile_context>

<pallas_src>
import jax
import jax.numpy as jnp
from jax.experimental import pallas as pl
from jax.experimental.pallas import tpu as pltpu


def _round_up(a, b):
    return ((a + b - 1) // b) * b


def _sc_kernel(l_ref, y_ref, o_ref):
    """One row-tile of the SC forward: out_tile = L_rowtile @ Y_col.

    l_ref : (tile_n, 2K*N)   fused Laplacian row tile [Ld_0|..|Ld_{K-1}|Lu_0|..]
    y_ref : (2K*N, out_pad)  precomputed per-tap features, resident across grid
    o_ref : (tile_n, out_pad)
    """
    o_ref[...] = jnp.dot(l_ref[...], y_ref[...],
                         preferred_element_type=jnp.float32).astype(o_ref.dtype)


def prepare_l_cat(LdStack, LuStack):
    """Fused Laplacian layout (N, 2K*N): column-block k is the k-th tap."""
    N = LdStack.shape[0]
    KK = LdStack.shape[-1] + LuStack.shape[-1]
    L_cat = jnp.concatenate([LdStack, LuStack], axis=-1)            # (N, N, 2K)
    return jnp.transpose(L_cat, (0, 2, 1)).reshape(N, KK * N)       # (N, 2K*N)


def prepare_w_stack(coeff_P, coeff_Q):
    """Stack parameters as (in, 2K, out); tap k matches L_cat column-block k."""
    W = jnp.concatenate([coeff_P, coeff_Q], axis=-1)                # (in, out, 2K)
    return jnp.transpose(W, (0, 2, 1))                              # (in, 2K, out)


def sc_forward(LdStack, LuStack, x, coeff_P, coeff_Q, *,
               compute_dtype=jnp.float32, row_tile=256, lane=128,
               vmem_budget_bytes=24 * 1024 * 1024):
    """Pallas implementation of SC.forward.

    LdStack, LuStack : (N, N, K)
    x                : (N, in_size)
    coeff_P, coeff_Q : (in_size, out_size, K)
    returns          : (N, out_size) float32
    """
    N, _ = x.shape
    K = LdStack.shape[-1]
    out_size = coeff_P.shape[1]
    KK = 2 * K

    # TODO(synk): hoist these two layout preps out of the per-call path
    # (L_cat is static per complex; store parameters directly in W_stack layout).
    L_cat = prepare_l_cat(LdStack, LuStack)                         # (N, 2K*N)
    W_stack = prepare_w_stack(coeff_P, coeff_Q)                     # (in, 2K, out)

    # Stage 1, hoisted out of the kernel and computed once in f32:
    # Y_col[k*N + n, :] = (x @ W_k)[n, :]
    Y = jnp.einsum('ni,iko->kno', x.astype(jnp.float32),
                   W_stack.astype(jnp.float32))                     # (2K, N, out)
    Y = Y.reshape(KK * N, out_size)

    # Lane-dense output: pad the feature dim to a multiple of 128 so output
    # stores are unmasked full-vreg vst; padding sliced off below.
    out_pad = _round_up(out_size, lane)
    if out_pad > out_size:
        Y = jnp.pad(Y, ((0, 0), (0, out_pad - out_size)))

    # Row tile: multiple of 8 sublanes, VMEM-aware (fits v7x's 64 MiB VMEM /
    # the ~32 MiB scoped default on all generations with headroom).
    itemsize = jnp.dtype(compute_dtype).itemsize
    tile_n = max(8, min(_round_up(row_tile, 8), _round_up(N, 8)))

    def _vmem_bytes(t):
        return (2 * t * KK * N * itemsize          # L row tile, double-buffered
                + KK * N * out_pad * itemsize      # resident Y
                + 2 * t * out_pad * 4)             # f32 output tile, double-buffered

    while tile_n > 8 and _vmem_bytes(tile_n) > vmem_budget_bytes:
        tile_n = max(8, _round_up(tile_n // 2, 8))

    # Pad rows to a multiple of tile_n (zero rows in L -> garbage-free padded
    # output rows that are sliced off), keeping the (8,128) tiling intact.
    n_pad = _round_up(N, tile_n)
    if n_pad > N:
        L_cat = jnp.pad(L_cat, ((0, n_pad - N), (0, 0)))

    L_cat = L_cat.astype(compute_dtype)
    Y = Y.astype(compute_dtype)

    grid = (n_pad // tile_n,)

    out_padded = pl.pallas_call(
        _sc_kernel,
        out_shape=jax.ShapeDtypeStruct((n_pad, out_pad), jnp.float32),
        grid_spec=pltpu.PrefetchScalarGridSpec(
            num_scalar_prefetch=0,
            grid=grid,
            in_specs=[
                pl.BlockSpec((tile_n, KK * N), lambda i: (i, 0)),    # L row tile
                pl.BlockSpec((KK * N, out_pad), lambda i: (0, 0)),   # Y (resident)
            ],
            out_specs=pl.BlockSpec((tile_n, out_pad), lambda i: (i, 0)),
        ),
        compiler_params=pltpu.CompilerParams(
            # Row tiles are independent; with >=2 grid steps v7x's two
            # TensorCores can split them (no effect at grid=(1,)).
            dimension_semantics=("parallel",),
        ),
    )(L_cat, Y)

    return out_padded[:N, :out_size]


def initial_weights(key, in_size, out_size, K, gamma=0.1, variance=1.0):
    """JAX replica of the PyTorch initial_weights: variance * U[0,1), tap i scaled by gamma**i."""
    w = variance * jax.random.uniform(key, (in_size, out_size, K), dtype=jnp.float32)
    scale = gamma ** jnp.arange(K, dtype=jnp.float32)
    return w * scale[None, None, :]


def sc_reference(LdStack, LuStack, x, coeff_P, coeff_Q):
    """Pure-JAX reference matching the PyTorch forward."""
    K = LdStack.shape[-1]
    out = 0.0
    for i in range(K):
        out = out + LdStack[:, :, i] @ x @ coeff_P[:, :, i]
        out = out + LuStack[:, :, i] @ x @ coeff_Q[:, :, i]
    return out


if __name__ == "__main__":
    # Small shapes consistent with the module: N simplices, in/out features, K taps.
    N, in_size, out_size, K = 16, 8, 32, 3
    gamma, variance = 0.1, 1.0

    key = jax.random.PRNGKey(0)
    k_ld, k_lu, k_x, k_p, k_q = jax.random.split(key, 5)

    LdStack = jax.random.normal(k_ld, (N, N, K), dtype=jnp.float32)
    LuStack = jax.random.normal(k_lu, (N, N, K), dtype=jnp.float32)
    x = jax.random.normal(k_x, (N, in_size), dtype=jnp.float32)

    coeff_P = initial_weights(k_p, in_size, out_size, K, gamma=gamma, variance=variance)
    coeff_Q = initial_weights(k_q, in_size, out_size, K, gamma=gamma, variance=variance)

    ref = sc_reference(LdStack, LuStack, x, coeff_P, coeff_Q)

    # f32 path: must match the reference tightly.
    out = sc_forward(LdStack, LuStack, x, coeff_P, coeff_Q)
    out = jax.block_until_ready(out)
    assert out.shape == (N, out_size), out.shape
    assert jnp.allclose(out, ref, atol=1e-4, rtol=1e-4), float(jnp.max(jnp.abs(out - ref)))

    # bf16 operand path (MXU-native; f32 accumulation inside the dot): loose check.
    out_bf16 = jax.block_until_ready(
        sc_forward(LdStack, LuStack, x, coeff_P, coeff_Q, compute_dtype=jnp.bfloat16))
    rel_err = float(jnp.max(jnp.abs(out_bf16 - ref)) / (jnp.max(jnp.abs(ref)) + 1e-6))
    assert rel_err < 5e-2, rel_err

    print("KERNEL_OK")
</pallas_src>

<mosaic_0001>
module attributes {stable_mosaic.version = 11 : i64} {
  func.func @_sc_kernel(%arg0: i32, %arg1: memref<16x96xf32, #tpu.memory_space<vmem>>, %arg2: memref<96x128xf32, #tpu.memory_space<vmem>>, %arg3: memref<16x128xf32, #tpu.memory_space<vmem>>) attributes {dimension_semantics = [#tpu.dimension_semantics<parallel>], iteration_bounds = array<i64: 1>, scalar_prefetch = 0 : i64, scratch_operands = 0 : i64, tpu.core_type = #tpu.core_type<tc>, window_params = [{transform_indices = @transform_0, window_bounds = array<i64: 16, 96>}, {pipeline_mode = #tpu.pipeline_mode<synchronous>, transform_indices = @transform_1, window_bounds = array<i64: 96, 128>}, {transform_indices = @transform_2, window_bounds = array<i64: 16, 128>}]} {
    %c0 = arith.constant 0 : index
    %c0_0 = arith.constant 0 : index
    %0 = vector.load %arg1[%c0, %c0_0] : memref<16x96xf32, #tpu.memory_space<vmem>>, vector<16x96xf32>
    %c0_1 = arith.constant 0 : index
    %c0_2 = arith.constant 0 : index
    %1 = vector.load %arg2[%c0_1, %c0_2] : memref<96x128xf32, #tpu.memory_space<vmem>>, vector<96x128xf32>
    %cst = arith.constant dense<0.000000e+00> : vector<16x128xf32>
    %2 = tpu.matmul %0, %1, %cst {dimension_numbers = #tpu.dot_dimension_numbers<[1], [0], [0], [1], [0, 0, 1, 1], [], []>} : vector<16x96xf32>, vector<96x128xf32>, vector<16x128xf32> -> vector<16x128xf32>
    %c0_3 = arith.constant 0 : index
    %c0_4 = arith.constant 0 : index
    %3 = vector.load %arg3[%c0_3, %c0_4] : memref<16x128xf32, #tpu.memory_space<vmem>>, vector<16x128xf32>
    tpu.vector_store %arg3[%c0_3, %c0_4], %2 {strides = array<i32>} : memref<16x128xf32, #tpu.memory_space<vmem>>, vector<16x128xf32>,
    return
  }
  func.func @transform_0(%arg0: i32) -> (i32, i32) {
    %c0_i32 = arith.constant 0 : i32
    %c0_i32_0 = arith.constant 0 : i32
    return %arg0, %c0_i32 : i32, i32
  }
  func.func @transform_1(%arg0: i32) -> (i32, i32) {
    %c0_i32 = arith.constant 0 : i32
    %c0_i32_0 = arith.constant 0 : i32
    %c0_i32_1 = arith.constant 0 : i32
    return %c0_i32, %c0_i32_0 : i32, i32
  }
  func.func @transform_2(%arg0: i32) -> (i32, i32) {
    %c0_i32 = arith.constant 0 : i32
    %c0_i32_0 = arith.constant 0 : i32
    return %arg0, %c0_i32 : i32, i32
  }
}

</mosaic_0001>

<llo_original>
// kernel: tpu_custom_call.1
$region0: #{tpu_custom_call.1}
  #allocation0 [shape = 'u32[]', space=smem, size = 0x4, offset = 0x4, fixed_abs, tag = 'smem constant byte address 0x4 - core index']
  #allocation1 [shape = 'u32[144,128]{1,0:T(1,128)}', space=vmem, size = 0x12000, scoped, tag = 'internal scratch']
  %s0 = inlined_call_operand.hbm [shape: f32[16,96], index: 0, kind: input, shape index: {}]
  %s1 = inlined_call_operand.hbm [shape: f32[96,128], index: 1, kind: input, shape index: {}]
  %s2 = inlined_call_operand.hbm [shape: f32[16,128], index: 2, kind: output, shape index: {}]
  %s3 = sld [smem:[#allocation0]]
  $region26: #{tpu_custom_call.1} parent=0
    _
  %s5 = ssub.s32 1, %s3
  %s6 = scalar_select 0, %s5, %s3
  $region1: #{tpu_custom_call.1} parent=0
    #allocation2 [shape = 'u8[8192]{0}', space=vmem, size = 0x2000, scoped, tag = 'input window, operand 0, single buffered']
    #allocation3 [shape = 's32[1]{0}', space=sflag, size = 0x4, scoped, tag = 'scoped memory for tpu_custom_call.1']
    #allocation4 [shape = 's32[1]{0}', space=sflag, size = 0x4, scoped, tag = 'scoped memory for tpu_custom_call.1']
    #allocation5 [shape = 'u8[49152]{0}', space=vmem, size = 0xc000, scoped, tag = 'input window, operand 1, single buffered']
    #allocation6 [shape = 's32[1]{0}', space=sflag, size = 0x4, scoped, tag = 'scoped memory for tpu_custom_call.1']
    #allocation7 [shape = 'u8[8192]{0}', space=vmem, size = 0x2000, scoped, tag = 'output window, operand 0, single buffered']
    %7 = vsyncpa [#allocation3], 0
    %8 = vsyncpa [#allocation6], 0
    %9 = vsyncpa [#allocation4], 0
    // Predicated region
    $region2: #{tpu_custom_call.1} parent=1 // pred_check
      _
    $region3: #{tpu_custom_call.1} parent=1 // pred_check_branch
      %11 = sbr.rel (0) target = $region5
    $region4: #{tpu_custom_call.1} parent=1 // pred_region
      %s13 = ssub.s32 256, 256
      %14 = vsyncadd [#allocation3], %s13
      %s15 = sshll.u32 [#allocation2], 4
      %s16 = int_to_ptr.vmem [resolvable:$true] %s15
      %21 = dma.hbm_to_vmem [thread:$0]  %s0, 256, %s16, [#allocation3], 128, 128, 8
    $region5: #{tpu_custom_call.1} parent=1 // pred_fallthru
      _
    // Predicated region
    $region6: #{tpu_custom_call.1} parent=1 // pred_check
      _
    $region7: #{tpu_custom_call.1} parent=1 // pred_check_branch
      %23 = sbr.rel (0) target = $region9
    $region8: #{tpu_custom_call.1} parent=1 // pred_region
      %s25 = ssub.s32 1536, 1536
      %26 = vsyncadd [#allocation6], %s25
      %s27 = sshll.u32 [#allocation5], 4
      %s28 = int_to_ptr.vmem [resolvable:$true] %s27
      %33 = dma.hbm_to_vmem [thread:$0]  %s1, 1536, %s28, [#allocation6], 128, 128, 8
    $region9: #{tpu_custom_call.1} parent=1 // pred_fallthru
      _
    // Predicated region
    $region10: #{tpu_custom_call.1} parent=1 // pred_check
      _
    $region11: #{tpu_custom_call.1} parent=1 // pred_check_branch
      %35 = sbr.rel (0) target = $region13
    $region12: #{tpu_custom_call.1} parent=1 // pred_region
      %36 = dma.done [#allocation3], 256
    $region13: #{tpu_custom_call.1} parent=1 // pred_fallthru
      _
    // Predicated region
    $region14: #{tpu_custom_call.1} parent=1 // pred_check
      _
    $region15: #{tpu_custom_call.1} parent=1 // pred_check_branch
      %38 = sbr.rel (0) target = $region17
    $region16: #{tpu_custom_call.1} parent=1 // pred_region
      %39 = dma.done [#allocation6], 1536
    $region17: #{tpu_custom_call.1} parent=1 // pred_fallthru
      _
    %v40 = vld [vmem:[#allocation2] sm:$0xff]
    %v41 = vld [vmem:[#allocation2 + $0x8] sm:$0xff]
    %v42 = vld [vmem:[#allocation5] sm:$0xff]
    %v43 = vld [vmem:[#allocation5 + $0x8] sm:$0xff]
    %v44 = vld [vmem:[#allocation5 + $0x10] sm:$0xff]
    %v45 = vld [vmem:[#allocation5 + $0x18] sm:$0xff]
    %v46 = vld [vmem:[#allocation5 + $0x20] sm:$0xff]
    %v47 = vld [vmem:[#allocation5 + $0x28] sm:$0xff]
    %v48 = vld [vmem:[#allocation5 + $0x30] sm:$0xff]
    %v49 = vld [vmem:[#allocation5 + $0x38] sm:$0xff]
    %v50 = vld [vmem:[#allocation5 + $0x40] sm:$0xff]
    %v51 = vld [vmem:[#allocation5 + $0x48] sm:$0xff]
    %v52 = vld [vmem:[#allocation5 + $0x50] sm:$0xff]
    %v53 = vld [vmem:[#allocation5 + $0x58] sm:$0xff]
    %vm54 = vcmask 785408
    %v56 = vsel %vm54, %v40, 0
    %v59 = vsel %vm54, %v41, 0
    %61 = vmatprep.subr.mxu0 0.0
    %62 = vmatpush1.msra.mxu0 %v42
    %63 = vmatprep.subr.mxu0 0.0
    %64 = vmatpush1.msra.mxu0 %v43
    %65 = vmatprep.subr.mxu0 0.0
    %66 = vmatpush1.msra.mxu0 %v44
    %67 = vmatprep.subr.mxu0 0.0
    %68 = vmatpush1.msra.mxu0 %v45
    %69 = vmatprep.subr.mxu0 0.0
    %70 = vmatpush1.msra.mxu0 %v46
    %71 = vmatprep.subr.mxu0 0.0
    %72 = vmatpush1.msra.mxu0 %v47
    %73 = vmatprep.subr.mxu0 0.0
    %74 = vmatpush1.msra.mxu0 %v48
    %75 = vmatprep.subr.mxu0 0.0
    %76 = vmatpush1.msra.mxu0 %v49
    %77 = vmatprep.subr.mxu0 0.0
    %78 = vmatpush1.msra.mxu0 %v50
    %79 = vmatprep.subr.mxu0 0.0
    %80 = vmatpush1.msra.mxu0 %v51
    %81 = vmatprep.subr.mxu0 0.0
    %82 = vmatpush1.msra.mxu0 %v52
    %83 = vmatprep.subr.mxu0 0.0
    %84 = vmatpush1.msra.mxu0 %v53
    %85 = vmatprep.subr.mxu0 0.0
    %86 = vmatpush1.msra.mxu0 0.0
    %87 = vmatprep.subr.mxu0 0.0
    %88 = vmatpush1.msra.mxu0 0.0
    %89 = vmatprep.subr.mxu0 0.0
    %90 = vmatpush1.msra.mxu0 0.0
    %91 = vmatprep.subr.mxu0 0.0
    %92 = vmatpush1.msra.mxu0 0.0
    %93 = vmatprep.subr.mxu0 0.0
    %94 = vmatpush1.msra.mxu0 0.0
    %95 = vmatprep.subr.mxu0 0.0
    %96 = vmatpush1.msra.mxu0 0.0
    %97 = vmatprep.subr.mxu0 0.0
    %98 = vmatpush1.msra.mxu0 0.0
    %99 = vmatprep.subr.mxu0 0.0
    %100 = vmatpush1.msra.mxu0 0.0
    %101 = vmatprep.subr.mxu0 0.0
    %102 = vmatpush1.msra.mxu0 0.0
    %103 = vmatprep.subr.mxu0 0.0
    %104 = vmatpush1.msra.mxu0 0.0
    %105 = vmatprep.subr.mxu0 0.0
    %106 = vmatpush1.msra.mxu0 0.0
    %107 = vmatprep.subr.mxu0 0.0
    %108 = vmatpush1.msra.mxu0 0.0
    %109 = vmatprep.subr.mxu0 0.0
    %110 = vmatpush1.msra.mxu0 0.0
    %111 = vmatprep.subr.mxu0 0.0
    %112 = vmatpush1.msra.mxu0 0.0
    %113 = vmatprep.subr.mxu0 0.0
    %114 = vmatpush1.msra.mxu0 0.0
    %115 = vmatprep.subr.mxu0 0.0
    %116 = vmatpush1.msra.mxu0 0.0
    %117 = vmatprep.subr.mxu0 0.0
    %118 = vmatpush1.msra.mxu0 0.0
    %119 = vmatprep.subr.mxu0 0.0
    %120 = vmatpush1.msra.mxu0 0.0
    %121 = vmatprep.subr.mxu0 0.0
    %122 = vmatpush1.msra.mxu0 0.0
    %123 = vmatprep.subr.mxu0 0.0
    %124 = vmatpush1.msra.mxu0 0.0
    %125 = vmatprep.mubr.f32.mxu0 0.0
    %126 = vmatmul.mubr.f32.gmra.mrb[0].mxu0 %v56
    %v127 = vpop.f32.mrb[0].mxu0
    %v128 = vadd.f32 0.0, %v127
    %v129 = vpop.f32.mrb[0].mxu0
    %130 = vmatprep.mubr.f32.mxu0 0.0
    %131 = vmatmul.mubr.f32.gmra.mrb[0].mxu0 %v59
    %v132 = vpop.f32.mrb[0].mxu0
    %v133 = vadd.f32 0.0, %v132
    %v134 = vpop.f32.mrb[0].mxu0
    %135 = vdwg.mxu0
    %136 = vst [vmem:[#allocation7] sm:$0xff] %v128
    %137 = vst [vmem:[#allocation7 + $0x8] sm:$0xff] %v133
    // Predicated region
    $region18: #{tpu_custom_call.1} parent=1 // pred_check
      _
    $region19: #{tpu_custom_call.1} parent=1 // pred_check_branch
      %139 = sbr.rel (0) target = $region21
    $region20: #{tpu_custom_call.1} parent=1 // pred_region
      %s141 = ssub.s32 256, 256
      %142 = vsyncadd [#allocation4], %s141
      %s143 = sshll.u32 [#allocation7], 4
      %s144 = int_to_ptr.vmem [resolvable:$true] %s143
      %149 = dma.vmem_to_hbm [thread:$0]  %s144, 256, %s2, [#allocation4], 128, 128, 8
    $region21: #{tpu_custom_call.1} parent=1 // pred_fallthru
      _
    // Predicated region
    $region22: #{tpu_custom_call.1} parent=1 // pred_check
      _
    $region23: #{tpu_custom_call.1} parent=1 // pred_check_branch
      %151 = sbr.rel (0) target = $region25
    $region24: #{tpu_custom_call.1} parent=1 // pred_region
      %152 = dma.done [#allocation4], 256
    $region25: #{tpu_custom_call.1} parent=1 // pred_fallthru
      _
    %153 = vsyncpa [#allocation3], 1
    %154 = vsyncpa [#allocation6], 1
    %155 = vsyncpa [#allocation4], 1

</llo_original>
